<compile_context>
chip_gen: v5e
topology: v5e:2x2
jax: 0.10.0
libtpu: 0.0.40
codegen_flags: <defaults>
</compile_context>

<pallas_src>
import functools

import jax
import jax.numpy as jnp
from jax.experimental import pallas as pl
from jax.experimental.pallas import tpu as pltpu


def _mean_concat_kernel(a_ref, h_ref, hdst_ref, out_ref, acc_ref, deg_ref,
                        *, num_dst, num_src, tile_k, mask_k):
    # a_ref    : (TM, TK)  adjacency tile (dst rows x src cols, values in {0,1})
    # h_ref    : (TK, F)   source-node feature tile
    # hdst_ref : (TM, F)   dst nodes' own features
    # out_ref  : (TM, 2F)  output tile  [h1 | h_dst]
    # acc_ref  : (TM, F)   f32 accumulator for A @ v      (persists across K)
    # deg_ref  : (TM, 1)   f32 accumulator for in-degree  (persists across K)
    k = pl.program_id(1)

    @pl.when(k == 0)
    def _init():
        acc_ref[...] = jnp.zeros_like(acc_ref)
        deg_ref[...] = jnp.zeros_like(deg_ref)

    a = a_ref[...]
    h = h_ref[...]
    k0 = k * tile_k

    # Drop padded K columns (grid uses cdiv; last K tile may overhang num_src).
    if mask_k:
        col = k0 + jax.lax.broadcasted_iota(jnp.int32, a.shape, dimension=1)
        a = jnp.where(col < num_src, a, 0.0)

    # Build the module's `v`: source rows < num_dst contribute zeros
    # (and padded rows >= num_src are zeroed so they can't poison the matmul).
    row = k0 + jax.lax.broadcasted_iota(jnp.int32, (h.shape[0], 1), dimension=0)
    valid = row >= num_dst
    if mask_k:
        valid = valid & (row < num_src)
    v = jnp.where(valid, h, 0.0)

    acc_ref[...] += jnp.dot(a, v, preferred_element_type=jnp.float32)   # MXU
    deg_ref[...] += jnp.sum(a, axis=1, keepdims=True)                   # XLU reduce

    @pl.when(k == pl.num_programs(1) - 1)
    def _finalize():
        # DGL mean with zero in-degree yields 0; the numerator is exactly 0 for
        # those rows, so dividing by max(deg, 1) reproduces that.
        inv_deg = pl.reciprocal(jnp.maximum(deg_ref[...], 1.0), approx=False)
        h1 = acc_ref[...] * inv_deg
        out_ref[...] = jnp.concatenate(
            [h1, hdst_ref[...].astype(jnp.float32)], axis=1
        ).astype(out_ref.dtype)


def id_model_full_mean(adj, h, *, tile_m=None, tile_k=None):
    """adj: [num_dst, num_src] dense {0,1} in-edge adjacency (dst <- src).
       h:   [num_src, F] source-node features (F = 3*hidden_dim in the module).
       Returns [num_dst, 2*F] = concat([mean_neighbors(v), h[:num_dst]], axis=1)."""
    num_dst, num_src = adj.shape
    assert h.shape[0] == num_src
    feat = h.shape[1]

    adj = adj.astype(jnp.float32)
    h = h.astype(jnp.float32)
    h_dst = h[:num_dst]  # dst nodes' own features (src[:num_dst] in the DGL block)

    # Large tiles are the biggest perf lever; cap them so the double-buffered
    # working set stays well inside scoped VMEM on v5e (16 MiB) / v6e (32 MiB)
    # / v7x (32 MiB scoped, 64 MiB physical).  No divisibility asserts: the
    # grid uses cdiv and padded K columns/rows are masked in-kernel.
    if tile_m is None:
        tile_m = num_dst if num_dst <= 512 else 512     # 512 is a multiple of 8
    if tile_k is None:
        tile_k = num_src if num_src <= 1024 else 1024   # 1024 is a multiple of 128

    grid_m = pl.cdiv(num_dst, tile_m)
    grid_k = pl.cdiv(num_src, tile_k)
    mask_k = (grid_k * tile_k != num_src)

    kernel = functools.partial(
        _mean_concat_kernel,
        num_dst=num_dst, num_src=num_src, tile_k=tile_k, mask_k=mask_k)

    return pl.pallas_call(
        kernel,
        out_shape=jax.ShapeDtypeStruct((num_dst, 2 * feat), h.dtype),
        grid=(grid_m, grid_k),
        in_specs=[
            pl.BlockSpec((tile_m, tile_k), lambda i, k: (i, k)),  # adjacency
            pl.BlockSpec((tile_k, feat), lambda i, k: (k, 0)),    # src features
            pl.BlockSpec((tile_m, feat), lambda i, k: (i, 0)),    # dst features
        ],
        out_specs=pl.BlockSpec((tile_m, 2 * feat), lambda i, k: (i, 0)),
        scratch_shapes=[
            pltpu.VMEM((tile_m, feat), jnp.float32),   # A @ v accumulator
            pltpu.VMEM((tile_m, 1), jnp.float32),      # in-degree accumulator
        ],
        compiler_params=pltpu.CompilerParams(
            dimension_semantics=("parallel", "arbitrary")),
    )(adj, h, h_dst)


def id_model_full_mean_reference(adj, h):
    """Pure-JAX reference mirroring the PyTorch/DGL forward."""
    num_dst = adj.shape[0]
    v = jnp.concatenate(
        [jnp.zeros((num_dst, h.shape[1]), h.dtype), h[num_dst:]], axis=0)
    deg = adj.sum(axis=1, keepdims=True)
    h1 = (adj @ v) / jnp.maximum(deg, 1.0)
    return jnp.concatenate([h1, h[:num_dst]], axis=1)


if __name__ == "__main__":
    key = jax.random.PRNGKey(0)
    hidden_dim = 32
    feat = 3 * hidden_dim   # the module's src feature width is 3*hidden_dim

    # --- case 1: small graph, single-block tiling ---------------------------
    num_dst, num_src = 16, 64
    k1, k2, key = jax.random.split(key, 3)
    h = jax.random.normal(k1, (num_src, feat), dtype=jnp.float32)
    adj = (jax.random.uniform(k2, (num_dst, num_src)) < 0.3).astype(jnp.float32)
    adj = adj.at[jnp.arange(num_dst), jnp.arange(num_dst)].set(1.0)  # self-edges

    out = jax.block_until_ready(id_model_full_mean(adj, h))
    ref = id_model_full_mean_reference(adj, h)
    assert out.shape == (num_dst, 2 * feat)
    assert jnp.allclose(out, ref, atol=1e-5, rtol=1e-5), "case 1 mismatch"

    # --- case 2: multi-tile grid with a partial (masked) K block ------------
    num_dst, num_src = 24, 320
    k1, k2, key = jax.random.split(key, 3)
    h = jax.random.normal(k1, (num_src, feat), dtype=jnp.float32)
    adj = (jax.random.uniform(k2, (num_dst, num_src)) < 0.1).astype(jnp.float32)
    adj = adj.at[jnp.arange(num_dst), jnp.arange(num_dst)].set(1.0)

    out = jax.block_until_ready(id_model_full_mean(adj, h, tile_m=8, tile_k=128))
    ref = id_model_full_mean_reference(adj, h)
    assert out.shape == (num_dst, 2 * feat)
    assert jnp.allclose(out, ref, atol=1e-5, rtol=1e-5), "case 2 mismatch"

    print("KERNEL_OK")
</pallas_src>

<mosaic_0001>
module attributes {stable_mosaic.version = 11 : i64} {
  func.func @_mean_concat_kernel(%arg0: i32, %arg1: i32, %arg2: memref<16x64xf32, #tpu.memory_space<vmem>>, %arg3: memref<64x96xf32, #tpu.memory_space<vmem>>, %arg4: memref<16x96xf32, #tpu.memory_space<vmem>>, %arg5: memref<16x192xf32, #tpu.memory_space<vmem>>, %arg6: memref<16x96xf32, #tpu.memory_space<vmem>>, %arg7: memref<16x1xf32, #tpu.memory_space<vmem>>) attributes {dimension_semantics = [#tpu.dimension_semantics<parallel>, #tpu.dimension_semantics<arbitrary>], iteration_bounds = array<i64: 1, 1>, scalar_prefetch = 0 : i64, scratch_operands = 2 : i64, tpu.core_type = #tpu.core_type<tc>, window_params = [{transform_indices = @transform_0, window_bounds = array<i64: 16, 64>}, {transform_indices = @transform_1, window_bounds = array<i64: 64, 96>}, {transform_indices = @transform_2, window_bounds = array<i64: 16, 96>}, {transform_indices = @transform_3, window_bounds = array<i64: 16, 192>}]} {
    %c0_i32 = arith.constant 0 : i32
    %0 = arith.cmpi eq, %arg1, %c0_i32 : i32
    %1 = arith.extui %0 : i1 to i32
    %c0_i32_0 = arith.constant 0 : i32
    %2 = arith.cmpi ne, %1, %c0_i32_0 : i32
    scf.if %2 {
      %cst_16 = arith.constant 0.000000e+00 : f32
      %27 = vector.broadcast %cst_16 : f32 to vector<16x96xf32>
      %c0_17 = arith.constant 0 : index
      %c0_18 = arith.constant 0 : index
      %28 = vector.load %arg6[%c0_17, %c0_18] : memref<16x96xf32, #tpu.memory_space<vmem>>, vector<16x96xf32>
      tpu.vector_store %arg6[%c0_17, %c0_18], %27 {strides = array<i32>} : memref<16x96xf32, #tpu.memory_space<vmem>>, vector<16x96xf32>,
      %cst_19 = arith.constant 0.000000e+00 : f32
      %29 = vector.broadcast %cst_19 : f32 to vector<16x1xf32>
      %c0_20 = arith.constant 0 : index
      %c0_21 = arith.constant 0 : index
      %30 = vector.load %arg7[%c0_20, %c0_21] : memref<16x1xf32, #tpu.memory_space<vmem>>, vector<16x1xf32>
      tpu.vector_store %arg7[%c0_20, %c0_21], %29 {strides = array<i32>} : memref<16x1xf32, #tpu.memory_space<vmem>>, vector<16x1xf32>,
    } else {
    }
    %c0 = arith.constant 0 : index
    %c0_1 = arith.constant 0 : index
    %3 = vector.load %arg2[%c0, %c0_1] : memref<16x64xf32, #tpu.memory_space<vmem>>, vector<16x64xf32>
    %c0_2 = arith.constant 0 : index
    %c0_3 = arith.constant 0 : index
    %4 = vector.load %arg3[%c0_2, %c0_3] : memref<64x96xf32, #tpu.memory_space<vmem>>, vector<64x96xf32>
    %c64_i32 = arith.constant 64 : i32
    %5 = arith.muli %arg1, %c64_i32 : i32
    %6 = tpu.iota {dimensions = array<i32: 0>} : vector<64x1xi32>
    %7 = vector.broadcast %5 : i32 to vector<64x1xi32>
    %8 = arith.addi %7, %6 : vector<64x1xi32>
    %c16_i32 = arith.constant 16 : i32
    %9 = vector.broadcast %c16_i32 : i32 to vector<64x1xi32>
    %10 = arith.cmpi sge, %8, %9 : vector<64x1xi32>
    %cst = arith.constant 0.000000e+00 : f32
    %11 = vector.shape_cast %10 : vector<64x1xi1> to vector<64x1xi1>
    %12 = vector.broadcast %11 : vector<64x1xi1> to vector<64x96xi1>
    %13 = vector.broadcast %cst : f32 to vector<64x96xf32>
    %14 = arith.select %12, %4, %13 : vector<64x96xi1>, vector<64x96xf32>
    %c0_4 = arith.constant 0 : index
    %c0_5 = arith.constant 0 : index
    %15 = vector.load %arg6[%c0_4, %c0_5] : memref<16x96xf32, #tpu.memory_space<vmem>>, vector<16x96xf32>
    %cst_6 = arith.constant dense<0.000000e+00> : vector<16x96xf32>
    %16 = tpu.matmul %3, %14, %cst_6 {dimension_numbers = #tpu.dot_dimension_numbers<[1], [0], [0], [1], [0, 0, 1, 1], [], []>} : vector<16x64xf32>, vector<64x96xf32>, vector<16x96xf32> -> vector<16x96xf32>
    %17 = arith.addf %15, %16 : vector<16x96xf32>
    %c0_7 = arith.constant 0 : index
    %c0_8 = arith.constant 0 : index
    %18 = vector.load %arg6[%c0_7, %c0_8] : memref<16x96xf32, #tpu.memory_space<vmem>>, vector<16x96xf32>
    tpu.vector_store %arg6[%c0_7, %c0_8], %17 {strides = array<i32>} : memref<16x96xf32, #tpu.memory_space<vmem>>, vector<16x96xf32>,
    %c0_9 = arith.constant 0 : index
    %c0_10 = arith.constant 0 : index
    %19 = vector.load %arg7[%c0_9, %c0_10] : memref<16x1xf32, #tpu.memory_space<vmem>>, vector<16x1xf32>
    %cst_11 = arith.constant dense<0.000000e+00> : vector<16xf32>
    %20 = vector.multi_reduction <add>, %3, %cst_11 [1] : vector<16x64xf32> to vector<16xf32>
    %21 = vector.shape_cast %20 : vector<16xf32> to vector<16x1xf32>
    %22 = arith.addf %19, %21 : vector<16x1xf32>
    %c0_12 = arith.constant 0 : index
    %c0_13 = arith.constant 0 : index
    %23 = vector.load %arg7[%c0_12, %c0_13] : memref<16x1xf32, #tpu.memory_space<vmem>>, vector<16x1xf32>
    tpu.vector_store %arg7[%c0_12, %c0_13], %22 {strides = array<i32>} : memref<16x1xf32, #tpu.memory_space<vmem>>, vector<16x1xf32>,
    %c0_i32_14 = arith.constant 0 : i32
    %24 = arith.cmpi eq, %arg1, %c0_i32_14 : i32
    %25 = arith.extui %24 : i1 to i32
    %c0_i32_15 = arith.constant 0 : i32
    %26 = arith.cmpi ne, %25, %c0_i32_15 : i32
    scf.if %26 {
      %c0_16 = arith.constant 0 : index
      %c0_17 = arith.constant 0 : index
      %27 = vector.load %arg7[%c0_16, %c0_17] : memref<16x1xf32, #tpu.memory_space<vmem>>, vector<16x1xf32>
      %cst_18 = arith.constant 1.000000e+00 : f32
      %28 = vector.broadcast %cst_18 : f32 to vector<16x1xf32>
      %29 = arith.maximumf %27, %28 : vector<16x1xf32>
      %30 = tpu.reciprocal %29 : vector<16x1xf32> -> vector<16x1xf32>
      %c0_19 = arith.constant 0 : index
      %c0_20 = arith.constant 0 : index
      %31 = vector.load %arg6[%c0_19, %c0_20] : memref<16x96xf32, #tpu.memory_space<vmem>>, vector<16x96xf32>
      %32 = vector.broadcast %30 : vector<16x1xf32> to vector<16x96xf32>
      %33 = arith.mulf %31, %32 : vector<16x96xf32>
      %c0_21 = arith.constant 0 : index
      %c0_22 = arith.constant 0 : index
      %34 = vector.load %arg4[%c0_21, %c0_22] : memref<16x96xf32, #tpu.memory_space<vmem>>, vector<16x96xf32>
      %35 = tpu.concatenate %33, %34 in 1 : vector<16x96xf32>, vector<16x96xf32> -> vector<16x192xf32>
      %c0_23 = arith.constant 0 : index
      %c0_24 = arith.constant 0 : index
      %36 = vector.load %arg5[%c0_23, %c0_24] : memref<16x192xf32, #tpu.memory_space<vmem>>, vector<16x192xf32>
      tpu.vector_store %arg5[%c0_23, %c0_24], %35 {strides = array<i32>} : memref<16x192xf32, #tpu.memory_space<vmem>>, vector<16x192xf32>,
    } else {
    }
    return
  }
  func.func @transform_0(%arg0: i32, %arg1: i32) -> (i32, i32) {
    %c0_i32 = arith.constant 0 : i32
    return %arg0, %arg1 : i32, i32
  }
  func.func @transform_1(%arg0: i32, %arg1: i32) -> (i32, i32) {
    %c0_i32 = arith.constant 0 : i32
    %c0_i32_0 = arith.constant 0 : i32
    return %arg1, %c0_i32 : i32, i32
  }
  func.func @transform_2(%arg0: i32, %arg1: i32) -> (i32, i32) {
    %c0_i32 = arith.constant 0 : i32
    %c0_i32_0 = arith.constant 0 : i32
    return %arg0, %c0_i32 : i32, i32
  }
  func.func @transform_3(%arg0: i32, %arg1: i32) -> (i32, i32) {
    %c0_i32 = arith.constant 0 : i32
    %c0_i32_0 = arith.constant 0 : i32
    return %arg0, %c0_i32 : i32, i32
  }
}

</mosaic_0001>

<llo_original>
// kernel: tpu_custom_call.1
$region0: #{tpu_custom_call.1}
  #allocation0 [shape = 'u32[]', space=smem, size = 0x4, offset = 0x4, fixed_abs, tag = 'smem constant byte address 0x4 - core index']
  #allocation1 [shape = 'u32[72,128]{1,0:T(1,128)}', space=vmem, size = 0x9000, scoped, tag = 'internal scratch']
  #allocation2 [shape = 'f32[16,96]{1,0:T(8,128)}', space=vmem, size = 0x2000, scoped, tag = 'scratch operand']
  #allocation3 [shape = 'f32[16,1]{1,0:T(8,128)}', space=vmem, size = 0x2000, scoped, tag = 'scratch operand']
  %s0 = inlined_call_operand.hbm [shape: f32[16,64], index: 0, kind: input, shape index: {}]
  %s1 = inlined_call_operand.hbm [shape: f32[64,96], index: 1, kind: input, shape index: {}]
  %s2 = inlined_call_operand.hbm [shape: f32[16,96], index: 2, kind: input, shape index: {}]
  %s3 = inlined_call_operand.hbm [shape: f32[16,192], index: 3, kind: output, shape index: {}]
  %s4 = sld [smem:[#allocation0]]
  $region42: #{tpu_custom_call.1} parent=0
    _
  %s6 = ssub.s32 1, %s4
  %s7 = scalar_select 0, %s6, %s4
  $region1: #{tpu_custom_call.1} parent=0
    #allocation4 [shape = 'u8[8192]{0}', space=vmem, size = 0x2000, scoped, tag = 'input window, operand 0, single buffered']
    #allocation5 [shape = 's32[1]{0}', space=sflag, size = 0x4, scoped, tag = 'scoped memory for tpu_custom_call.1']
    #allocation6 [shape = 's32[1]{0}', space=sflag, size = 0x4, scoped, tag = 'scoped memory for tpu_custom_call.1']
    #allocation7 [shape = 'u8[32768]{0}', space=vmem, size = 0x8000, scoped, tag = 'input window, operand 1, single buffered']
    #allocation8 [shape = 's32[1]{0}', space=sflag, size = 0x4, scoped, tag = 'scoped memory for tpu_custom_call.1']
    #allocation9 [shape = 'u8[8192]{0}', space=vmem, size = 0x2000, scoped, tag = 'input window, operand 2, single buffered']
    #allocation10 [shape = 'u8[16384]{0}', space=vmem, size = 0x4000, scoped, tag = 'output window, operand 0, single buffered']
    %8 = vsyncpa [#allocation5], 0
    %9 = vsyncpa [#allocation8], 0
    %10 = vsyncpa [#allocation6], 0
    // Predicated region
    $region2: #{tpu_custom_call.1} parent=1 // pred_check
      _
    $region3: #{tpu_custom_call.1} parent=1 // pred_check_branch
      %12 = sbr.rel (0) target = $region5
    $region4: #{tpu_custom_call.1} parent=1 // pred_region
      %14 = vsyncadd [#allocation5], 0
      %s15 = sshll.u32 %s0, 4
      %s16 = int_to_ptr.hbm [resolvable:$true] %s15
      %s17 = sshll.u32 [#allocation4], 4
      %s18 = int_to_ptr.vmem [resolvable:$true] %s17
      %23 = dma.hbm_to_vmem [thread:$0]  %s16, 256, %s18, [#allocation5], 128, 128, 8
    $region5: #{tpu_custom_call.1} parent=1 // pred_fallthru
      _
    // Predicated region
    $region6: #{tpu_custom_call.1} parent=1 // pred_check
      _
    $region7: #{tpu_custom_call.1} parent=1 // pred_check_branch
      %25 = sbr.rel (0) target = $region9
    $region8: #{tpu_custom_call.1} parent=1 // pred_region
      %27 = vsyncadd [#allocation8], 0
      %s28 = sshll.u32 %s1, 4
      %s29 = int_to_ptr.hbm [resolvable:$true] %s28
      %s30 = sshll.u32 [#allocation7], 4
      %s31 = int_to_ptr.vmem [resolvable:$true] %s30
      %36 = dma.hbm_to_vmem [thread:$0]  %s29, 1024, %s31, [#allocation8], 128, 128, 8
    $region9: #{tpu_custom_call.1} parent=1 // pred_fallthru
      _
    // Predicated region
    $region10: #{tpu_custom_call.1} parent=1 // pred_check
      _
    $region11: #{tpu_custom_call.1} parent=1 // pred_check_branch
      %38 = sbr.rel (0) target = $region13
    $region12: #{tpu_custom_call.1} parent=1 // pred_region
      %40 = vsyncadd [#allocation8], 0
      %s41 = sshll.u32 %s2, 4
      %s42 = int_to_ptr.hbm [resolvable:$true] %s41
      %s43 = sshll.u32 [#allocation9], 4
      %s44 = int_to_ptr.vmem [resolvable:$true] %s43
      %49 = dma.hbm_to_vmem [thread:$0]  %s42, 256, %s44, [#allocation8], 128, 128, 8
    $region13: #{tpu_custom_call.1} parent=1 // pred_fallthru
      _
    // Predicated region
    $region14: #{tpu_custom_call.1} parent=1 // pred_check
      _
    $region15: #{tpu_custom_call.1} parent=1 // pred_check_branch
      %51 = sbr.rel (0) target = $region17
    $region16: #{tpu_custom_call.1} parent=1 // pred_region
      %53 = dma.done [#allocation5], 256
    $region17: #{tpu_custom_call.1} parent=1 // pred_fallthru
      _
    // Predicated region
    $region18: #{tpu_custom_call.1} parent=1 // pred_check
      _
    $region19: #{tpu_custom_call.1} parent=1 // pred_check_branch
      %55 = sbr.rel (0) target = $region21
    $region20: #{tpu_custom_call.1} parent=1 // pred_region
      %57 = dma.done [#allocation8], 1024
    $region21: #{tpu_custom_call.1} parent=1 // pred_fallthru
      _
    // Predicated region
    $region22: #{tpu_custom_call.1} parent=1 // pred_check
      _
    $region23: #{tpu_custom_call.1} parent=1 // pred_check_branch
      %59 = sbr.rel (0) target = $region25
    $region24: #{tpu_custom_call.1} parent=1 // pred_region
      %61 = dma.done [#allocation8], 256
    $region25: #{tpu_custom_call.1} parent=1 // pred_fallthru
      _
    %p62 = scmp.eq.s32.totalorder 0, 0
    // Predicated region
    $region26: #{tpu_custom_call.1} parent=1 // pred_check
      %p63 = pneg %p62
    $region27: #{tpu_custom_call.1} parent=1 // pred_check_branch
      %65 = sbr.rel (%p63) target = $region29
    $region28: #{tpu_custom_call.1} parent=1 // pred_region
      %vm66 = vcmask 785408
      %67 = vst.msk [vmem:[#allocation2] sm:$0xff] %vm66, 0.0
      %68 = vst.msk [vmem:[#allocation2 + $0x8] sm:$0xff] %vm66, 0.0
      %vm69 = vcmask 7168
      %70 = vst.msk [vmem:[#allocation3] sm:$0xff] %vm69, 0.0
      %71 = vst.msk [vmem:[#allocation3 + $0x8] sm:$0xff] %vm69, 0.0
    $region29: #{tpu_custom_call.1} parent=1 // pred_fallthru
      _
    %v72 = vld [vmem:[#allocation4] sm:$0xff]
    %v73 = vld [vmem:[#allocation4 + $0x8] sm:$0xff]
    %v74 = vld [vmem:[#allocation7] sm:$0xff]
    %v75 = vld [vmem:[#allocation7 + $0x8] sm:$0xff]
    %v76 = vld [vmem:[#allocation7 + $0x10] sm:$0xff]
    %v77 = vld [vmem:[#allocation7 + $0x18] sm:$0xff]
    %v78 = vld [vmem:[#allocation7 + $0x20] sm:$0xff]
    %v79 = vld [vmem:[#allocation7 + $0x28] sm:$0xff]
    %v80 = vld [vmem:[#allocation7 + $0x30] sm:$0xff]
    %v81 = vld [vmem:[#allocation7 + $0x38] sm:$0xff]
    %s82 = smul.u32 0, 64
    %v83 = vlaneseq
    %v84 = vshrl.u32 %v83, 7
    %v85 = vadd.s32 %v84, 8
    %v86 = vadd.s32 %v84, 16
    %v87 = vadd.s32 %v84, 24
    %v88 = vadd.s32 %v84, 32
    %v89 = vadd.s32 %v84, 40
    %v90 = vadd.s32 %v84, 48
    %v91 = vadd.s32 %v84, 56
    %v92 = vstv %s82
    %v93 = vadd.s32 %v92, %v84
    %v94 = vadd.s32 %v92, %v85
    %v95 = vadd.s32 %v92, %v86
    %v96 = vadd.s32 %v92, %v87
    %v97 = vadd.s32 %v92, %v88
    %v98 = vadd.s32 %v92, %v89
    %v99 = vadd.s32 %v92, %v90
    %v100 = vadd.s32 %v92, %v91
    %vm101 = vcmp.ge.s32.totalorder %v93, 16
    %vm102 = vcmp.ge.s32.totalorder %v94, 16
    %vm103 = vcmp.ge.s32.totalorder %v95, 16
    %vm104 = vcmp.ge.s32.totalorder %v96, 16
    %vm105 = vcmp.ge.s32.totalorder %v97, 16
    %vm106 = vcmp.ge.s32.totalorder %v98, 16
    %vm107 = vcmp.ge.s32.totalorder %v99, 16
    %vm108 = vcmp.ge.s32.totalorder %v100, 16
    %v109 = vsel %vm101, 1, 0
    %v110 = vsel %vm102, 1, 0
    %v111 = vsel %vm103, 1, 0
    %v112 = vsel %vm104, 1, 0
    %v113 = vsel %vm105, 1, 0
    %v114 = vsel %vm106, 1, 0
    %v115 = vsel %vm107, 1, 0
    %v116 = vsel %vm108, 1, 0
    %vm117 = vcmp.eq.s32.totalorder %v109, 1
    %vm118 = vcmp.eq.s32.totalorder %v110, 1
    %vm119 = vcmp.eq.s32.totalorder %v111, 1
    %vm120 = vcmp.eq.s32.totalorder %v112, 1
    %vm121 = vcmp.eq.s32.totalorder %v113, 1
    %vm122 = vcmp.eq.s32.totalorder %v114, 1
    %vm123 = vcmp.eq.s32.totalorder %v115, 1
    %vm124 = vcmp.eq.s32.totalorder %v116, 1
    %v125 = vsel %vm117, %v74, 0.0
    %v126 = vsel %vm118, %v75, 0.0
    %v127 = vsel %vm119, %v76, 0.0
    %v128 = vsel %vm120, %v77, 0.0
    %v129 = vsel %vm121, %v78, 0.0
    %v130 = vsel %vm122, %v79, 0.0
    %v131 = vsel %vm123, %v80, 0.0
    %v132 = vsel %vm124, %v81, 0.0
    %v133 = vld [vmem:[#allocation2] sm:$0xff]
    %v134 = vld [vmem:[#allocation2 + $0x8] sm:$0xff]
    %vm135 = vcmask 523264
    %v137 = vsel %vm135, %v72, 0
    %v140 = vsel %vm135, %v73, 0
    %142 = vmatpush.msra.mxu0 0.0
    %143 = vmatpush.msra.mxu0 0.0
    %144 = vmatpush.msra.mxu0 0.0
    %145 = vmatpush.msra.mxu0 0.0
    %146 = vmatpush.msra.mxu0 0.0
    %147 = vmatpush.msra.mxu0 0.0
    %148 = vmatpush.msra.mxu0 0.0
    %149 = vmatpush.msra.mxu0 0.0
    %150 = vmatpush.msra.mxu0 %v132
    %151 = vmatpush.msra.mxu0 %v131
    %152 = vmatpush.msra.mxu0 %v130
    %153 = vmatpush.msra.mxu0 %v129
    %154 = vmatpush.msra.mxu0 %v128
    %155 = vmatpush.msra.mxu0 %v127
    %156 = vmatpush.msra.mxu0 %v126
    %157 = vmatpush.msra.mxu0 %v125
    %158 = vmatmul.f32.gmra.mxu0 %v137
    %v159 = vpop.f32.mrf.mxu0
    %v160 = vadd.f32 0.0, %v159
    %161 = vmatmul.f32.gmra.mxu0 %v140
    %v162 = vpop.f32.mrf.mxu0
    %v163 = vadd.f32 0.0, %v162
    %164 = vdwg.mxu0
    %v165 = vadd.f32 %v133, %v160
    %v166 = vadd.f32 %v134, %v163
    %vm167 = vcmask 785408
    %168 = vst.msk [vmem:[#allocation2] sm:$0xff] %vm167, %v165
    %169 = vst.msk [vmem:[#allocation2 + $0x8] sm:$0xff] %vm167, %v166
    %v170 = vld [vmem:[#allocation3] sm:$0xff]
    %v171 = vld [vmem:[#allocation3 + $0x8] sm:$0xff]
    %v172 = vsel %vm135, %v72, 0.0
    %173 = vadd.xlane.f32.xlu0 %v172
    %v174 = vpop.xlane.xlu0 %173
    %v175 = vsel %vm135, %v73, 0.0
    %176 = vadd.xlane.f32.xlu0 %v175
    %v177 = vpop.xlane.xlu0 %176
    %v178 = vadd.f32 %v170, %v174
    %v179 = vadd.f32 %v171, %v177
    %vm180 = vcmask 7168
    %181 = vst.msk [vmem:[#allocation3] sm:$0xff] %vm180, %v178
    %182 = vst.msk [vmem:[#allocation3 + $0x8] sm:$0xff] %vm180, %v179
    // Predicated region
    $region30: #{tpu_custom_call.1} parent=1 // pred_check
      %p183 = pneg %p62
    $region31: #{tpu_custom_call.1} parent=1 // pred_check_branch
      %185 = sbr.rel (%p183) target = $region33
    $region32: #{tpu_custom_call.1} parent=1 // pred_region
      %v186 = vld [vmem:[#allocation3] sm:$0xff]
      %v187 = vld [vmem:[#allocation3 + $0x8] sm:$0xff]
      %v188 = vmax.f32 %v186, 1.0
      %v189 = vmax.f32 %v187, 1.0
      %v190 = vrcp.pop %v188
      %v191 = vmul.f32 %v188, %v190
      %v192 = vsub.f32 1.0, %v191
      %v193 = vmul.f32 %v190, %v192
      %v194 = vadd.f32 %v190, %v193
      %vm195 = vweird.f32 %v188
      %vm196 = vweird.f32 %v190
      %vm197 = vmor %vm195, %vm196
      %v198 = vsel %vm197, %v190, %v194
      %v199 = vand.u32 2147483647, %v188
      %vm200 = vcmp.eq.f32.partialorder %v199, 8.507059e+37
      %v201 = vand.u32 %v188, 2147483648
      %v202 = vor.u32 1.1754944e-38, %v201
      %v203 = vsel %vm200, %v202, %v198
      %v204 = vrcp.pop %v189
      %v205 = vmul.f32 %v189, %v204
      %v206 = vsub.f32 1.0, %v205
      %v207 = vmul.f32 %v204, %v206
      %v208 = vadd.f32 %v204, %v207
      %vm209 = vweird.f32 %v189
      %vm210 = vweird.f32 %v204
      %vm211 = vmor %vm209, %vm210
      %v212 = vsel %vm211, %v204, %v208
      %v213 = vand.u32 2147483647, %v189
      %vm214 = vcmp.eq.f32.partialorder %v213, 8.507059e+37
      %v215 = vand.u32 %v189, 2147483648
      %v216 = vor.u32 1.1754944e-38, %v215
      %v217 = vsel %vm214, %v216, %v212
      %v218 = vld [vmem:[#allocation2] sm:$0xff]
      %v219 = vld [vmem:[#allocation2 + $0x8] sm:$0xff]
      %221 = vset.pattern.permute.xlu0 0
      %222 = vperm.xlu0 %221, %v203
      %v223 = vpop.permute.xlu0 %222
      %226 = vset.pattern.permute.xlu0 0
      %227 = vperm.xlu0 %226, %v217
      %v228 = vpop.permute.xlu0 %227
      %v230 = vmul.f32 %v218, %v223
      %v231 = vmul.f32 %v219, %v228
      %v232 = vld [vmem:[#allocation9] sm:$0xff]
      %v233 = vld [vmem:[#allocation9 + $0x8] sm:$0xff]
      %236 = vrot.lane.b32.xlu0 %v232, 96
      %v237 = vpop.permute.xlu0 %236
      %238 = vrot.lane.b32.xlu0 %v233, 96
      %v239 = vpop.permute.xlu0 %238
      %v242 = vsel %vm167, %v230, %v237
      %v243 = vsel %vm167, %v231, %v239
      %244 = vst [vmem:[#allocation10] sm:$0xff] %v242
      %245 = vst.msk [vmem:[#allocation10 + $0x8] sm:$0xff] %vm135, %v237
      %246 = vst [vmem:[#allocation10 + $0x10] sm:$0xff] %v243
      %247 = vst.msk [vmem:[#allocation10 + $0x18] sm:$0xff] %vm135, %v239
    $region33: #{tpu_custom_call.1} parent=1 // pred_fallthru
      _
    // Predicated region
    $region34: #{tpu_custom_call.1} parent=1 // pred_check
      _
    $region35: #{tpu_custom_call.1} parent=1 // pred_check_branch
      %249 = sbr.rel (0) target = $region37
    $region36: #{tpu_custom_call.1} parent=1 // pred_region
      %251 = vsyncadd [#allocation6], 0
      %s252 = sshll.u32 [#allocation10], 4
      %s253 = int_to_ptr.vmem [resolvable:$true] %s252
      %s254 = sshll.u32 %s3, 4
      %s255 = int_to_ptr.hbm [resolvable:$true] %s254
      %260 = dma.vmem_to_hbm [thread:$0]  %s253, 512, %s255, [#allocation6], 256, 256, 16
    $region37: #{tpu_custom_call.1} parent=1 // pred_fallthru
      _
    // Predicated region
    $region38: #{tpu_custom_call.1} parent=1 // pred_check
      _
    $region39: #{tpu_custom_call.1} parent=1 // pred_check_branch
      %262 = sbr.rel (0) target = $region41
    $region40: #{tpu_custom_call.1} parent=1 // pred_region
      %264 = dma.done [#allocation6], 512
    $region41: #{tpu_custom_call.1} parent=1 // pred_fallthru
      _
    %265 = vsyncpa [#allocation5], 1
    %266 = vsyncpa [#allocation8], 1
    %267 = vsyncpa [#allocation6], 1

</llo_original>
